<compile_context>
chip_gen: v7x
topology: tpu7x:2x2x1
jax: 0.10.0
libtpu: 0.0.40
codegen_flags: <defaults>
</compile_context>

<pallas_src>
import jax
import jax.numpy as jnp
from jax.experimental import pallas as pl
from jax.experimental.pallas import tpu as pltpu


def _permute_sub_kernel(x_ref, o_ref):
    """x_ref: (23, 4, 5) f32 in VMEM; o_ref: (4, 5, 23) f32 in VMEM.

    out[i, j, k] = x[k, i, j] - 3.76
    Implemented as 4 statically-unrolled 2-D transposes (23,5) -> (5,23)
    plus a VPU subtract, written directly into the 3-D output ref.
    """
    x = x_ref[...]                                  # (23, 4, 5)
    c = jnp.float32(3.76)
    for i in range(x.shape[1]):                     # 4 iterations, unrolled
        # x[:, i, :] : (23, 5) -> transpose -> (5, 23)
        o_ref[i, :, :] = jnp.transpose(x[:, i, :], (1, 0)) - c


@jax.jit
def model_forward(x0):
    """x0: (23, 4, 5) float32 -> (4, 5, 23) float32 (== permute(1,2,0) - 3.76)."""
    D0, D1, D2 = x0.shape                           # (23, 4, 5)
    n = D0 * D1 * D2
    return pl.pallas_call(
        _permute_sub_kernel,
        out_shape=jax.ShapeDtypeStruct((D1, D2, D0), x0.dtype),
        # Full-array VMEM blocks, single grid point, no index_map needed.
        in_specs=[pl.BlockSpec(memory_space=pltpu.MemorySpace.VMEM)],
        out_specs=pl.BlockSpec(memory_space=pltpu.MemorySpace.VMEM),
        cost_estimate=pl.CostEstimate(
            flops=n,                                # one subtract per element
            bytes_accessed=2 * n * 4,               # read + write, f32
            transcendentals=0,
        ),
    )(x0)


def init_unused_conv_params(key):
    """Conv2d(3, 3, kernel_size=1, stride=1, padding=1) parameters.

    Deterministically initialized for module parity; never applied in forward
    (matches the PyTorch module, whose forward ignores self.conv).
    """
    kw, kb = jax.random.split(key)
    weight = jax.random.normal(kw, (3, 3, 1, 1), dtype=jnp.float32) * 0.1
    bias = jax.random.normal(kb, (3,), dtype=jnp.float32) * 0.1
    return weight, bias


if __name__ == "__main__":
    key = jax.random.PRNGKey(0)
    k_x, k_p = jax.random.split(key)

    # Same shape as the PyTorch example input: x0 = torch.randn(23, 4, 5)
    x0 = jax.random.normal(k_x, (23, 4, 5), dtype=jnp.float32)

    # Unused conv parameters (kept for module parity only).
    _conv_w, _conv_b = init_unused_conv_params(k_p)

    out = model_forward(x0)
    out = jax.block_until_ready(out)

    # Sanity check against the pure-JAX reference.
    ref = jnp.transpose(x0, (1, 2, 0)) - 3.76
    assert out.shape == (4, 5, 23), out.shape
    assert out.dtype == jnp.float32, out.dtype
    assert jnp.allclose(out, ref, atol=1e-6), "mismatch vs reference"

    print("KERNEL_OK")
</pallas_src>

<mosaic_0001>
module attributes {stable_mosaic.version = 11 : i64} {
  func.func @_permute_sub_kernel(%arg0: memref<23x4x5xf32, #tpu.memory_space<vmem>>, %arg1: memref<4x5x23xf32, #tpu.memory_space<vmem>>) attributes {dimension_semantics = [], scalar_prefetch = 0 : i64, scratch_operands = 0 : i64, tpu.core_type = #tpu.core_type<tc>} {
    %c0 = arith.constant 0 : index
    %c0_0 = arith.constant 0 : index
    %c0_1 = arith.constant 0 : index
    %0 = vector.load %arg0[%c0, %c0_0, %c0_1] : memref<23x4x5xf32, #tpu.memory_space<vmem>>, vector<23x4x5xf32>
    %1 = vector.extract_strided_slice %0 {offsets = [0, 0, 0], sizes = [23, 1, 5], strides = [1, 1, 1]} : vector<23x4x5xf32> to vector<23x1x5xf32>
    %2 = vector.shape_cast %1 : vector<23x1x5xf32> to vector<23x5xf32>
    %3 = tpu.transpose %2, [1, 0] : vector<23x5xf32> -> vector<5x23xf32>
    %cst = arith.constant 3.760000e+00 : f32
    %4 = vector.broadcast %cst : f32 to vector<5x23xf32>
    %5 = arith.subf %3, %4 : vector<5x23xf32>
    %c0_2 = arith.constant 0 : index
    %c0_3 = arith.constant 0 : index
    %c0_4 = arith.constant 0 : index
    %6 = vector.load %arg1[%c0_2, %c0_3, %c0_4] : memref<4x5x23xf32, #tpu.memory_space<vmem>>, vector<1x5x23xf32>
    %7 = vector.shape_cast %6 : vector<1x5x23xf32> to vector<5x23xf32>
    %8 = vector.shape_cast %5 : vector<5x23xf32> to vector<1x5x23xf32>
    tpu.vector_store %arg1[%c0_2, %c0_3, %c0_4], %8 {strides = array<i32>} : memref<4x5x23xf32, #tpu.memory_space<vmem>>, vector<1x5x23xf32>,
    %9 = vector.extract_strided_slice %0 {offsets = [0, 1, 0], sizes = [23, 1, 5], strides = [1, 1, 1]} : vector<23x4x5xf32> to vector<23x1x5xf32>
    %10 = vector.shape_cast %9 : vector<23x1x5xf32> to vector<23x5xf32>
    %11 = tpu.transpose %10, [1, 0] : vector<23x5xf32> -> vector<5x23xf32>
    %cst_5 = arith.constant 3.760000e+00 : f32
    %12 = vector.broadcast %cst_5 : f32 to vector<5x23xf32>
    %13 = arith.subf %11, %12 : vector<5x23xf32>
    %c1 = arith.constant 1 : index
    %c0_6 = arith.constant 0 : index
    %c0_7 = arith.constant 0 : index
    %14 = vector.load %arg1[%c1, %c0_6, %c0_7] : memref<4x5x23xf32, #tpu.memory_space<vmem>>, vector<1x5x23xf32>
    %15 = vector.shape_cast %14 : vector<1x5x23xf32> to vector<5x23xf32>
    %16 = vector.shape_cast %13 : vector<5x23xf32> to vector<1x5x23xf32>
    tpu.vector_store %arg1[%c1, %c0_6, %c0_7], %16 {strides = array<i32>} : memref<4x5x23xf32, #tpu.memory_space<vmem>>, vector<1x5x23xf32>,
    %17 = vector.extract_strided_slice %0 {offsets = [0, 2, 0], sizes = [23, 1, 5], strides = [1, 1, 1]} : vector<23x4x5xf32> to vector<23x1x5xf32>
    %18 = vector.shape_cast %17 : vector<23x1x5xf32> to vector<23x5xf32>
    %19 = tpu.transpose %18, [1, 0] : vector<23x5xf32> -> vector<5x23xf32>
    %cst_8 = arith.constant 3.760000e+00 : f32
    %20 = vector.broadcast %cst_8 : f32 to vector<5x23xf32>
    %21 = arith.subf %19, %20 : vector<5x23xf32>
    %c2 = arith.constant 2 : index
    %c0_9 = arith.constant 0 : index
    %c0_10 = arith.constant 0 : index
    %22 = vector.load %arg1[%c2, %c0_9, %c0_10] : memref<4x5x23xf32, #tpu.memory_space<vmem>>, vector<1x5x23xf32>
    %23 = vector.shape_cast %22 : vector<1x5x23xf32> to vector<5x23xf32>
    %24 = vector.shape_cast %21 : vector<5x23xf32> to vector<1x5x23xf32>
    tpu.vector_store %arg1[%c2, %c0_9, %c0_10], %24 {strides = array<i32>} : memref<4x5x23xf32, #tpu.memory_space<vmem>>, vector<1x5x23xf32>,
    %25 = vector.extract_strided_slice %0 {offsets = [0, 3, 0], sizes = [23, 1, 5], strides = [1, 1, 1]} : vector<23x4x5xf32> to vector<23x1x5xf32>
    %26 = vector.shape_cast %25 : vector<23x1x5xf32> to vector<23x5xf32>
    %27 = tpu.transpose %26, [1, 0] : vector<23x5xf32> -> vector<5x23xf32>
    %cst_11 = arith.constant 3.760000e+00 : f32
    %28 = vector.broadcast %cst_11 : f32 to vector<5x23xf32>
    %29 = arith.subf %27, %28 : vector<5x23xf32>
    %c3 = arith.constant 3 : index
    %c0_12 = arith.constant 0 : index
    %c0_13 = arith.constant 0 : index
    %30 = vector.load %arg1[%c3, %c0_12, %c0_13] : memref<4x5x23xf32, #tpu.memory_space<vmem>>, vector<1x5x23xf32>
    %31 = vector.shape_cast %30 : vector<1x5x23xf32> to vector<5x23xf32>
    %32 = vector.shape_cast %29 : vector<5x23xf32> to vector<1x5x23xf32>
    tpu.vector_store %arg1[%c3, %c0_12, %c0_13], %32 {strides = array<i32>} : memref<4x5x23xf32, #tpu.memory_space<vmem>>, vector<1x5x23xf32>,
    return
  }
}

</mosaic_0001>

<llo_original>
// kernel: model_forward.1
$region0: #{model_forward.1}
  #allocation0 [shape = 'u32[]', space=smem, size = 0x4, offset = 0x4, fixed_abs, tag = 'smem constant byte address 0x4 - core index']
  #allocation1 [shape = 'u32[144,128]{1,0:T(1,128)}', space=vmem, size = 0x12000, scoped, tag = 'internal scratch']
  %s0 = inlined_call_operand.vmem [shape: f32[23,4,5], index: 0, kind: input, shape index: {}]
  %s1 = inlined_call_operand.vmem [shape: f32[4,5,23], index: 1, kind: output, shape index: {}]
  %s2 = sld [smem:[#allocation0]]
  $region14: #{model_forward.1} parent=0
    _
  %s4 = ssub.s32 1, %s2
  %s5 = scalar_select 0, %s4, %s2
  // Predicated region
  $region2: #{model_forward.1} parent=0 // pred_check
    _
  $region3: #{model_forward.1} parent=0 // pred_check_branch
    %7 = sbr.rel (0) target = $region5
  $region4: #{model_forward.1} parent=0 // pred_region
    _
  $region5: #{model_forward.1} parent=0 // pred_fallthru
    _
  %v8 = vld [vmem:[%s0] sm:$0xf]
  %v9 = vld [vmem:[%s0 + $0x4] sm:$0xf]
  %v10 = vld [vmem:[%s0 + $0x8] sm:$0xf]
  %v11 = vld [vmem:[%s0 + $0xc] sm:$0xf]
  %v12 = vld [vmem:[%s0 + $0x10] sm:$0xf]
  %v13 = vld [vmem:[%s0 + $0x14] sm:$0xf]
  %v14 = vld [vmem:[%s0 + $0x18] sm:$0xf]
  %v15 = vld [vmem:[%s0 + $0x1c] sm:$0xf]
  %v16 = vld [vmem:[%s0 + $0x20] sm:$0xf]
  %v17 = vld [vmem:[%s0 + $0x24] sm:$0xf]
  %v18 = vld [vmem:[%s0 + $0x28] sm:$0xf]
  %v19 = vld [vmem:[%s0 + $0x2c] sm:$0xf]
  %v20 = vld [vmem:[%s0 + $0x30] sm:$0xf]
  %v21 = vld [vmem:[%s0 + $0x34] sm:$0xf]
  %v22 = vld [vmem:[%s0 + $0x38] sm:$0xf]
  %v23 = vld [vmem:[%s0 + $0x3c] sm:$0xf]
  %v24 = vld [vmem:[%s0 + $0x40] sm:$0xf]
  %v25 = vld [vmem:[%s0 + $0x44] sm:$0xf]
  %v26 = vld [vmem:[%s0 + $0x48] sm:$0xf]
  %v27 = vld [vmem:[%s0 + $0x4c] sm:$0xf]
  %v28 = vld [vmem:[%s0 + $0x50] sm:$0xf]
  %v29 = vld [vmem:[%s0 + $0x54] sm:$0xf]
  %v30 = vld [vmem:[%s0 + $0x58] sm:$0xf]
  %v54 = vrot.slane %v9, 7
  %vm55 = vcmask 1041409
  %v56 = vsel %vm55, %v54, %v8
  %v57 = vrot.slane %v10, 6
  %vm58 = vcmask 1042434
  %v59 = vsel %vm58, %v57, %v56
  %v60 = vrot.slane %v11, 5
  %vm61 = vcmask 1043459
  %v62 = vsel %vm61, %v60, %v59
  %v63 = vrot.slane %v12, 4
  %vm64 = vcmask 1044484
  %v65 = vsel %vm64, %v63, %v62
  %v66 = vrot.slane %v13, 3
  %vm67 = vcmask 1045509
  %v68 = vsel %vm67, %v66, %v65
  %v69 = vrot.slane %v14, 2
  %vm70 = vcmask 1046534
  %v71 = vsel %vm70, %v69, %v68
  %v72 = vrot.slane %v15, 1
  %vm73 = vcmask 1047559
  %v74 = vsel %vm73, %v72, %v71
  %v75 = vrot.slane %v17, 7
  %v76 = vsel %vm55, %v75, %v16
  %v77 = vrot.slane %v18, 6
  %v78 = vsel %vm58, %v77, %v76
  %v79 = vrot.slane %v19, 5
  %v80 = vsel %vm61, %v79, %v78
  %v81 = vrot.slane %v20, 4
  %v82 = vsel %vm64, %v81, %v80
  %v83 = vrot.slane %v21, 3
  %v84 = vsel %vm67, %v83, %v82
  %v85 = vrot.slane %v22, 2
  %v86 = vsel %vm70, %v85, %v84
  %v87 = vrot.slane %v23, 1
  %v88 = vsel %vm73, %v87, %v86
  %v89 = vrot.slane %v25, 7
  %v90 = vsel %vm55, %v89, %v24
  %v91 = vrot.slane %v26, 6
  %v92 = vsel %vm58, %v91, %v90
  %v93 = vrot.slane %v27, 5
  %v94 = vsel %vm61, %v93, %v92
  %v95 = vrot.slane %v28, 4
  %v96 = vsel %vm64, %v95, %v94
  %v97 = vrot.slane %v29, 3
  %v98 = vsel %vm67, %v97, %v96
  %v99 = vrot.slane %v30, 2
  %v100 = vsel %vm70, %v99, %v98
  %104 = vxpose.xlu0.b32.start [1/16] %v74, 128
  %105 = vxpose.xlu0.b32.cont [2/16] %v88, 128
  %106 = vxpose.xlu0.b32.cont [3/16] %v100, 128
  %107 = vxpose.xlu0.b32.cont [4/16] 0.0, 128
  %108 = vxpose.xlu0.b32.cont [5/16] 0.0, 128
  %109 = vxpose.xlu0.b32.cont [6/16] 0.0, 128
  %110 = vxpose.xlu0.b32.cont [7/16] 0.0, 128
  %111 = vxpose.xlu0.b32.cont [8/16] 0.0, 128
  %112 = vxpose.xlu0.b32.cont [9/16] 0.0, 128
  %113 = vxpose.xlu0.b32.cont [10/16] 0.0, 128
  %114 = vxpose.xlu0.b32.cont [11/16] 0.0, 128
  %115 = vxpose.xlu0.b32.cont [12/16] 0.0, 128
  %116 = vxpose.xlu0.b32.cont [13/16] 0.0, 128
  %117 = vxpose.xlu0.b32.cont [14/16] 0.0, 128
  %118 = vxpose.xlu0.b32.cont [15/16] 0.0, 128
  %119 = vxpose.xlu0.b32.end [16/16] 0.0, 128
  %v120 = vpop.trf.xlu0
  %v121 = vpop.trf.xlu0
  %v122 = vpop.trf.xlu0
  %v123 = vpop.trf.xlu0
  %v124 = vpop.trf.xlu0
  %v125 = vpop.trf.xlu0
  %v126 = vpop.trf.xlu0
  %v127 = vpop.trf.xlu0
  %v128 = vpop.trf.xlu0
  %v129 = vpop.trf.xlu0
  %v130 = vpop.trf.xlu0
  %v131 = vpop.trf.xlu0
  %v132 = vpop.trf.xlu0
  %v133 = vpop.trf.xlu0
  %v134 = vpop.trf.xlu0
  %v135 = vpop.trf.xlu0
  %v136 = vsub.f32 %v120, 3.76
  %vm137 = vcmask 184320
  %138 = vst.msk [vmem:[%s1] sm:$0x1f] %vm137, %v136
  %v139 = vrot.slane %v8, 1
  %v140 = vsel %vm55, %v9, %v139
  %v141 = vrot.slane %v10, 7
  %v142 = vsel %vm58, %v141, %v140
  %v143 = vrot.slane %v11, 6
  %v144 = vsel %vm61, %v143, %v142
  %v145 = vrot.slane %v12, 5
  %v146 = vsel %vm64, %v145, %v144
  %v147 = vrot.slane %v13, 4
  %v148 = vsel %vm67, %v147, %v146
  %v149 = vrot.slane %v14, 3
  %v150 = vsel %vm70, %v149, %v148
  %v151 = vrot.slane %v15, 2
  %v152 = vsel %vm73, %v151, %v150
  %v153 = vrot.slane %v16, 1
  %v154 = vsel %vm55, %v17, %v153
  %v155 = vrot.slane %v18, 7
  %v156 = vsel %vm58, %v155, %v154
  %v157 = vrot.slane %v19, 6
  %v158 = vsel %vm61, %v157, %v156
  %v159 = vrot.slane %v20, 5
  %v160 = vsel %vm64, %v159, %v158
  %v161 = vrot.slane %v21, 4
  %v162 = vsel %vm67, %v161, %v160
  %v163 = vrot.slane %v22, 3
  %v164 = vsel %vm70, %v163, %v162
  %v165 = vrot.slane %v23, 2
  %v166 = vsel %vm73, %v165, %v164
  %v167 = vrot.slane %v24, 1
  %v168 = vsel %vm55, %v25, %v167
  %v169 = vrot.slane %v26, 7
  %v170 = vsel %vm58, %v169, %v168
  %v171 = vrot.slane %v27, 6
  %v172 = vsel %vm61, %v171, %v170
  %v173 = vrot.slane %v28, 5
  %v174 = vsel %vm64, %v173, %v172
  %v175 = vrot.slane %v29, 4
  %v176 = vsel %vm67, %v175, %v174
  %v177 = vrot.slane %v30, 3
  %v178 = vsel %vm70, %v177, %v176
  %182 = vxpose.xlu0.b32.start [1/16] %v152, 128
  %183 = vxpose.xlu0.b32.cont [2/16] %v166, 128
  %184 = vxpose.xlu0.b32.cont [3/16] %v178, 128
  %185 = vxpose.xlu0.b32.cont [4/16] 0.0, 128
  %186 = vxpose.xlu0.b32.cont [5/16] 0.0, 128
  %187 = vxpose.xlu0.b32.cont [6/16] 0.0, 128
  %188 = vxpose.xlu0.b32.cont [7/16] 0.0, 128
  %189 = vxpose.xlu0.b32.cont [8/16] 0.0, 128
  %190 = vxpose.xlu0.b32.cont [9/16] 0.0, 128
  %191 = vxpose.xlu0.b32.cont [10/16] 0.0, 128
  %192 = vxpose.xlu0.b32.cont [11/16] 0.0, 128
  %193 = vxpose.xlu0.b32.cont [12/16] 0.0, 128
  %194 = vxpose.xlu0.b32.cont [13/16] 0.0, 128
  %195 = vxpose.xlu0.b32.cont [14/16] 0.0, 128
  %196 = vxpose.xlu0.b32.cont [15/16] 0.0, 128
  %197 = vxpose.xlu0.b32.end [16/16] 0.0, 128
  %v198 = vpop.trf.xlu0
  %v199 = vpop.trf.xlu0
  %v200 = vpop.trf.xlu0
  %v201 = vpop.trf.xlu0
  %v202 = vpop.trf.xlu0
  %v203 = vpop.trf.xlu0
  %v204 = vpop.trf.xlu0
  %v205 = vpop.trf.xlu0
  %v206 = vpop.trf.xlu0
  %v207 = vpop.trf.xlu0
  %v208 = vpop.trf.xlu0
  %v209 = vpop.trf.xlu0
  %v210 = vpop.trf.xlu0
  %v211 = vpop.trf.xlu0
  %v212 = vpop.trf.xlu0
  %v213 = vpop.trf.xlu0
  %v214 = vsub.f32 %v198, 3.76
  %s215 = scalar_lea.vmem %s1, 8
  %216 = vst.msk [vmem:[%s215] sm:$0x1f] %vm137, %v214
  %v217 = vrot.slane %v8, 2
  %v218 = vrot.slane %v9, 1
  %v219 = vsel %vm55, %v218, %v217
  %v220 = vsel %vm58, %v10, %v219
  %v221 = vrot.slane %v11, 7
  %v222 = vsel %vm61, %v221, %v220
  %v223 = vrot.slane %v12, 6
  %v224 = vsel %vm64, %v223, %v222
  %v225 = vrot.slane %v13, 5
  %v226 = vsel %vm67, %v225, %v224
  %v227 = vrot.slane %v14, 4
  %v228 = vsel %vm70, %v227, %v226
  %v229 = vrot.slane %v15, 3
  %v230 = vsel %vm73, %v229, %v228
  %v231 = vrot.slane %v16, 2
  %v232 = vrot.slane %v17, 1
  %v233 = vsel %vm55, %v232, %v231
  %v234 = vsel %vm58, %v18, %v233
  %v235 = vrot.slane %v19, 7
  %v236 = vsel %vm61, %v235, %v234
  %v237 = vrot.slane %v20, 6
  %v238 = vsel %vm64, %v237, %v236
  %v239 = vrot.slane %v21, 5
  %v240 = vsel %vm67, %v239, %v238
  %v241 = vrot.slane %v22, 4
  %v242 = vsel %vm70, %v241, %v240
  %v243 = vrot.slane %v23, 3
  %v244 = vsel %vm73, %v243, %v242
  %v245 = vrot.slane %v24, 2
  %v246 = vrot.slane %v25, 1
  %v247 = vsel %vm55, %v246, %v245
  %v248 = vsel %vm58, %v26, %v247
  %v249 = vrot.slane %v27, 7
  %v250 = vsel %vm61, %v249, %v248
  %v251 = vrot.slane %v28, 6
  %v252 = vsel %vm64, %v251, %v250
  %v253 = vrot.slane %v29, 5
  %v254 = vsel %vm67, %v253, %v252
  %v255 = vrot.slane %v30, 4
  %v256 = vsel %vm70, %v255, %v254
  %260 = vxpose.xlu0.b32.start [1/16] %v230, 128
  %261 = vxpose.xlu0.b32.cont [2/16] %v244, 128
  %262 = vxpose.xlu0.b32.cont [3/16] %v256, 128
  %263 = vxpose.xlu0.b32.cont [4/16] 0.0, 128
  %264 = vxpose.xlu0.b32.cont [5/16] 0.0, 128
  %265 = vxpose.xlu0.b32.cont [6/16] 0.0, 128
  %266 = vxpose.xlu0.b32.cont [7/16] 0.0, 128
  %267 = vxpose.xlu0.b32.cont [8/16] 0.0, 128
  %268 = vxpose.xlu0.b32.cont [9/16] 0.0, 128
  %269 = vxpose.xlu0.b32.cont [10/16] 0.0, 128
  %270 = vxpose.xlu0.b32.cont [11/16] 0.0, 128
  %271 = vxpose.xlu0.b32.cont [12/16] 0.0, 128
  %272 = vxpose.xlu0.b32.cont [13/16] 0.0, 128
  %273 = vxpose.xlu0.b32.cont [14/16] 0.0, 128
  %274 = vxpose.xlu0.b32.cont [15/16] 0.0, 128
  %275 = vxpose.xlu0.b32.end [16/16] 0.0, 128
  %v276 = vpop.trf.xlu0
  %v277 = vpop.trf.xlu0
  %v278 = vpop.trf.xlu0
  %v279 = vpop.trf.xlu0
  %v280 = vpop.trf.xlu0
  %v281 = vpop.trf.xlu0
  %v282 = vpop.trf.xlu0
  %v283 = vpop.trf.xlu0
  %v284 = vpop.trf.xlu0
  %v285 = vpop.trf.xlu0
  %v286 = vpop.trf.xlu0
  %v287 = vpop.trf.xlu0
  %v288 = vpop.trf.xlu0
  %v289 = vpop.trf.xlu0
  %v290 = vpop.trf.xlu0
  %v291 = vpop.trf.xlu0
  %v292 = vsub.f32 %v276, 3.76
  %s293 = scalar_lea.vmem %s1, 16
  %294 = vst.msk [vmem:[%s293] sm:$0x1f] %vm137, %v292
  %v295 = vrot.slane %v8, 3
  %v296 = vrot.slane %v9, 2
  %v297 = vsel %vm55, %v296, %v295
  %v298 = vrot.slane %v10, 1
  %v299 = vsel %vm58, %v298, %v297
  %v300 = vsel %vm61, %v11, %v299
  %v301 = vrot.slane %v12, 7
  %v302 = vsel %vm64, %v301, %v300
  %v303 = vrot.slane %v13, 6
  %v304 = vsel %vm67, %v303, %v302
  %v305 = vrot.slane %v14, 5
  %v306 = vsel %vm70, %v305, %v304
  %v307 = vrot.slane %v15, 4
  %v308 = vsel %vm73, %v307, %v306
  %v309 = vrot.slane %v16, 3
  %v310 = vrot.slane %v17, 2
  %v311 = vsel %vm55, %v310, %v309
  %v312 = vrot.slane %v18, 1
  %v313 = vsel %vm58, %v312, %v311
  %v314 = vsel %vm61, %v19, %v313
  %v315 = vrot.slane %v20, 7
  %v316 = vsel %vm64, %v315, %v314
  %v317 = vrot.slane %v21, 6
  %v318 = vsel %vm67, %v317, %v316
  %v319 = vrot.slane %v22, 5
  %v320 = vsel %vm70, %v319, %v318
  %v321 = vrot.slane %v23, 4
  %v322 = vsel %vm73, %v321, %v320
  %v323 = vrot.slane %v24, 3
  %v324 = vrot.slane %v25, 2
  %v325 = vsel %vm55, %v324, %v323
  %v326 = vrot.slane %v26, 1
  %v327 = vsel %vm58, %v326, %v325
  %v328 = vsel %vm61, %v27, %v327
  %v329 = vrot.slane %v28, 7
  %v330 = vsel %vm64, %v329, %v328
  %v331 = vrot.slane %v29, 6
  %v332 = vsel %vm67, %v331, %v330
  %v333 = vrot.slane %v30, 5
  %v334 = vsel %vm70, %v333, %v332
  %338 = vxpose.xlu0.b32.start [1/16] %v308, 128
  %339 = vxpose.xlu0.b32.cont [2/16] %v322, 128
  %340 = vxpose.xlu0.b32.cont [3/16] %v334, 128
  %341 = vxpose.xlu0.b32.cont [4/16] 0.0, 128
  %342 = vxpose.xlu0.b32.cont [5/16] 0.0, 128
  %343 = vxpose.xlu0.b32.cont [6/16] 0.0, 128
  %344 = vxpose.xlu0.b32.cont [7/16] 0.0, 128
  %345 = vxpose.xlu0.b32.cont [8/16] 0.0, 128
  %346 = vxpose.xlu0.b32.cont [9/16] 0.0, 128
  %347 = vxpose.xlu0.b32.cont [10/16] 0.0, 128
  %348 = vxpose.xlu0.b32.cont [11/16] 0.0, 128
  %349 = vxpose.xlu0.b32.cont [12/16] 0.0, 128
  %350 = vxpose.xlu0.b32.cont [13/16] 0.0, 128
  %351 = vxpose.xlu0.b32.cont [14/16] 0.0, 128
  %352 = vxpose.xlu0.b32.cont [15/16] 0.0, 128
  %353 = vxpose.xlu0.b32.end [16/16] 0.0, 128
  %v354 = vpop.trf.xlu0
  %v355 = vpop.trf.xlu0
  %v356 = vpop.trf.xlu0
  %v357 = vpop.trf.xlu0
  %v358 = vpop.trf.xlu0
  %v359 = vpop.trf.xlu0
  %v360 = vpop.trf.xlu0
  %v361 = vpop.trf.xlu0
  %v362 = vpop.trf.xlu0
  %v363 = vpop.trf.xlu0
  %v364 = vpop.trf.xlu0
  %v365 = vpop.trf.xlu0
  %v366 = vpop.trf.xlu0
  %v367 = vpop.trf.xlu0
  %v368 = vpop.trf.xlu0
  %v369 = vpop.trf.xlu0
  %v370 = vsub.f32 %v354, 3.76
  %s371 = scalar_lea.vmem %s1, 24
  %372 = vst.msk [vmem:[%s371] sm:$0x1f] %vm137, %v370
  // Predicated region
  $region6: #{model_forward.1} parent=0 // pred_check
    _
  $region7: #{model_forward.1} parent=0 // pred_check_branch
    %374 = sbr.rel (0) target = $region9
  $region8: #{model_forward.1} parent=0 // pred_region
    _
  $region9: #{model_forward.1} parent=0 // pred_fallthru
    _
  // Predicated region
  $region10: #{model_forward.1} parent=0 // pred_check
    _
  $region11: #{model_forward.1} parent=0 // pred_check_branch
    %376 = sbr.rel (0) target = $region13
  $region12: #{model_forward.1} parent=0 // pred_region
    _
  $region13: #{model_forward.1} parent=0 // pred_fallthru
    _

</llo_original>
